<compile_context>
chip_gen: v7x
topology: tpu7x:2x2x1
jax: 0.10.0
libtpu: 0.0.40
codegen_flags: <defaults>
</compile_context>

<pallas_src>
import jax
import jax.numpy as jnp
from jax import lax
from jax.experimental import pallas as pl
from jax.experimental.pallas import tpu as pltpu


def _round_up(x, m):
    return (x + m - 1) // m * m


# ---------------------------------------------------------------------------
# Pallas kernel builder: fused (stacked one-hot @ folded-W1) + MLP.
# Activations are feature-major: (features, tb) with batch on the lane axis.
# ---------------------------------------------------------------------------
def _make_kernel(n_cat, n_num, sum_v, n_hidden, compute_dtype):
    """Ref order:
         [xc  (n_cat, tb) int32  -- codes pre-shifted by per-feature vocab offsets]
         [xn  (n_num, tb) compute_dtype]
         [W1c (H1, sum_v) compute_dtype]   if n_cat > 0  (all folded emb tables)
         [W1n (H1, n_num) compute_dtype]   if n_num > 0
         b1  (H1, 1) f32
         (W_l (H_l, H_{l-1}) compute_dtype, b_l (H_l, 1) f32)  inner layers 2..n_hidden
         w_out (H_last, 1) f32, b_out (1, 1) f32
         o   (1, tb) f32
    """

    def kernel(*refs):
        it = iter(refs)
        xc_ref = next(it) if n_cat else None
        xn_ref = next(it) if n_num else None
        w1c_ref = next(it) if n_cat else None
        w1n_ref = next(it) if n_num else None
        b1_ref = next(it)
        hidden = [(next(it), next(it)) for _ in range(n_hidden - 1)]
        wout_ref = next(it)
        bout_ref = next(it)
        o_ref = next(it)

        tb = o_ref.shape[-1]

        # ---- layer 1: all embedding lookups as ONE stacked one-hot matmul ----
        acc = None
        if n_cat:
            # oh[r, b] = 1 iff r == shifted_code_f[b] for some feature f.
            # Feature vocab ranges are disjoint, so a logical-or chain of VPU
            # compares builds the stacked one-hot without any gather.
            iota = lax.broadcasted_iota(jnp.int32, (sum_v, tb), 0)
            oh = iota == xc_ref[pl.ds(0, 1), :]
            for f in range(1, n_cat):
                oh = jnp.logical_or(oh, iota == xc_ref[pl.ds(f, 1), :])
            oh = oh.astype(compute_dtype)                           # (sum_v, tb)
            acc = jnp.dot(w1c_ref[...], oh,
                          preferred_element_type=jnp.float32)       # (H1, tb) f32
        if n_num:
            d = jnp.dot(w1n_ref[...], xn_ref[...],
                        preferred_element_type=jnp.float32)         # (H1, tb) f32
            acc = d if acc is None else acc + d
        # bias + ReLU in f32 (dropout p=0.0 in eval mode -> no-op)
        h = jnp.maximum(acc + b1_ref[...], 0.0)                     # (H1, tb)

        # ---- inner hidden layers: Linear -> ReLU ----
        for w_ref, b_ref in hidden:
            h = jnp.dot(w_ref[...], h.astype(compute_dtype),
                        preferred_element_type=jnp.float32) + b_ref[...]
            h = jnp.maximum(h, 0.0)

        # ---- final 1-unit layer: VPU multiply + sublane (XLU) reduce, no MXU ----
        out = jnp.sum(h * wout_ref[...], axis=0, keepdims=True) + bout_ref[...]
        o_ref[...] = out.astype(o_ref.dtype)                        # (1, tb) lane-dense

    return kernel


# ---------------------------------------------------------------------------
# Wrapper: host-side layout prep + pallas_call
# ---------------------------------------------------------------------------
def ent_emb_forward(x, params, *, tb=512, compute_dtype=jnp.bfloat16):
    emb_tables = params["emb_tables"]
    weights = params["weights"]     # list of (in, out) f32  (== PyTorch W.T)
    biases = params["biases"]       # list of (1, out) f32
    n_cat = len(emb_tables)
    emb_dims = [int(t.shape[1]) for t in emb_tables]
    vocab_sizes = [int(t.shape[0]) for t in emb_tables]
    B, n_feat = x.shape
    n_num = n_feat - n_cat
    n_hidden = len(weights) - 1
    assert n_hidden >= 1, "expect at least one hidden dense layer"

    # --- fold embedding tables into the first Linear's weight slices --------
    # h1 contribution of category value v of feature f == table_f[v] @ W1_slice_f,
    # so (table_f @ W1_slice_f).T is an (H1, V_f) matrix; a one-hot matmul with
    # it is exactly nn.Embedding lookup + that slice of Linear-1.  All folded
    # slices are concatenated along the vocab axis -> one (H1, sum_V) matrix,
    # and codes are pre-shifted by per-feature vocab offsets so the kernel
    # builds a single stacked one-hot.  Out-of-range codes give a zero one-hot
    # (silent), whereas PyTorch nn.Embedding would raise.
    w1 = weights[0]
    offs = [0]
    for d in emb_dims:
        offs.append(offs[-1] + d)
    if n_cat:
        m_mats = [(emb_tables[f] @ w1[offs[f]:offs[f + 1], :]).T
                  for f in range(n_cat)]
        w1_cat = jnp.concatenate(m_mats, axis=1).astype(compute_dtype)  # (H1, sum_V)
        v_offs = [0]
        for v in vocab_sizes:
            v_offs.append(v_offs[-1] + v)
        sum_v = v_offs[-1]
    else:
        w1_cat, sum_v = None, 0
    w1_num = w1[offs[-1]:, :].T.astype(compute_dtype)          # (H1, n_num)
    b1 = biases[0].T.astype(jnp.float32)                       # (H1, 1)
    hidden_ws = [w.T.astype(compute_dtype) for w in weights[1:-1]]
    hidden_bs = [b.T.astype(jnp.float32) for b in biases[1:-1]]
    w_out = weights[-1].astype(jnp.float32)                    # (H_last, 1)
    b_out = biases[-1].astype(jnp.float32).reshape(1, 1)       # (1, 1)

    # --- batch tiling (lane axis = batch) ------------------------------------
    tb = min(int(tb), _round_up(B, 128))
    tb = _round_up(tb, 128)
    Bp = _round_up(B, tb)
    if Bp != B:
        x = jnp.pad(x, ((0, Bp - B), (0, 0)))   # cat code 0 is valid; rows dropped later

    if n_cat:
        xc = (x[:, :n_cat].astype(jnp.int32)
              + jnp.asarray(v_offs[:-1], jnp.int32)[None, :]).T  # (n_cat, Bp) shifted
    xn = x[:, n_cat:].T.astype(compute_dtype)                    # (n_num, Bp)

    def full_spec(a):
        return pl.BlockSpec(a.shape, lambda i: (0,) * a.ndim)

    in_arrays, in_specs = [], []
    if n_cat:
        in_arrays.append(xc)
        in_specs.append(pl.BlockSpec((n_cat, tb), lambda i: (0, i)))
    if n_num:
        in_arrays.append(xn)
        in_specs.append(pl.BlockSpec((n_num, tb), lambda i: (0, i)))
    if n_cat:
        in_arrays.append(w1_cat)
        in_specs.append(full_spec(w1_cat))
    if n_num:
        in_arrays.append(w1_num)
        in_specs.append(full_spec(w1_num))
    in_arrays.append(b1)
    in_specs.append(full_spec(b1))
    for w, b in zip(hidden_ws, hidden_bs):
        in_arrays += [w, b]
        in_specs += [full_spec(w), full_spec(b)]
    in_arrays += [w_out, b_out]
    in_specs += [full_spec(w_out), full_spec(b_out)]

    # Explicit VMEM budget (v7x has 64 MiB physical, 32 MiB scoped default).
    try:
        cap = pltpu.get_tpu_info().vmem_capacity_bytes
        vmem_limit = min(64 << 20, int(cap * 0.5))
    except Exception:
        vmem_limit = None

    kernel = _make_kernel(n_cat, n_num, sum_v, n_hidden, compute_dtype)

    out = pl.pallas_call(
        kernel,
        out_shape=jax.ShapeDtypeStruct((1, Bp), jnp.float32),
        grid_spec=pltpu.PrefetchScalarGridSpec(
            num_scalar_prefetch=0,
            grid=(Bp // tb,),
            in_specs=in_specs,
            out_specs=pl.BlockSpec((1, tb), lambda i: (0, i)),
        ),
        compiler_params=pltpu.CompilerParams(
            dimension_semantics=("parallel",),   # batch axis shards across TCs
            vmem_limit_bytes=vmem_limit),
    )(*in_arrays)

    return out[0, :B].reshape(B, 1)


# ---------------------------------------------------------------------------
# Parameter init (deterministic, mirrors the PyTorch module's __init__ scheme)
# ---------------------------------------------------------------------------
def init_params(key, vocab_sizes, emb_dims, n_num, dense_layers):
    """Embeddings: U(-0.05, 0.05).  Linear: U(-1/sqrt(fan_in), 1/sqrt(fan_in))."""
    params = {}
    keys = jax.random.split(key, len(vocab_sizes) + 2 * (len(dense_layers) + 1))
    k_iter = iter(keys)

    emb_tables = []
    for v, d in zip(vocab_sizes, emb_dims):
        emb_tables.append(
            jax.random.uniform(next(k_iter), (v, d), jnp.float32, -0.05, 0.05))
    params["emb_tables"] = emb_tables

    in_size = sum(emb_dims) + n_num
    arch = [in_size] + list(dense_layers) + [1]
    weights, biases = [], []
    for fan_in, fan_out in zip(arch[:-1], arch[1:]):
        bound = 1.0 / (fan_in ** 0.5)
        # stored as (in, out) == PyTorch weight.T
        weights.append(jax.random.uniform(
            next(k_iter), (fan_in, fan_out), jnp.float32, -bound, bound))
        biases.append(jax.random.uniform(
            next(k_iter), (1, fan_out), jnp.float32, -bound, bound))
    params["weights"] = weights
    params["biases"] = biases
    return params


# ---------------------------------------------------------------------------
# Pure-JAX reference of EntEmbNN.forward (eval mode)
# ---------------------------------------------------------------------------
def ent_emb_forward_ref(x, params):
    n_cat = len(params["emb_tables"])
    embs = [jnp.take(t, x[:, i].astype(jnp.int32), axis=0)
            for i, t in enumerate(params["emb_tables"])]
    h = jnp.concatenate(embs + [x[:, n_cat:]], axis=1)
    ws, bs = params["weights"], params["biases"]
    for w, b in zip(ws[:-1], bs[:-1]):
        h = jnp.maximum(h @ w + b, 0.0)
    return h @ ws[-1] + bs[-1]


if __name__ == "__main__":
    key = jax.random.PRNGKey(0)

    # Small synthetic config consistent with the module:
    #   2 categorical features (vocab 7 and 5, emb dims 3 and 4),
    #   5 numeric features, dense_layers=[32, 16]  ->  12 -> 32 -> 16 -> 1
    batch = 256                    # tb=128 below -> 2 parallel grid steps
    vocab_sizes = [7, 5]
    emb_dims = [3, 4]
    n_num = 5
    dense_layers = [32, 16]

    k_param, k_cat0, k_cat1, k_num = jax.random.split(key, 4)
    params = init_params(k_param, vocab_sizes, emb_dims, n_num, dense_layers)

    cat0 = jax.random.randint(k_cat0, (batch, 1), 0, vocab_sizes[0])
    cat1 = jax.random.randint(k_cat1, (batch, 1), 0, vocab_sizes[1])
    num = jax.random.normal(k_num, (batch, n_num), jnp.float32)
    # Same float input layout the PyTorch dataloader feeds forward():
    # categorical codes (as floats) first, numeric features after.
    x = jnp.concatenate(
        [cat0.astype(jnp.float32), cat1.astype(jnp.float32), num], axis=1)

    # Exact-semantics f32 path (tight check) and fast bf16 path (loose check).
    out_f32 = ent_emb_forward(x, params, tb=128, compute_dtype=jnp.float32)
    out_bf16 = ent_emb_forward(x, params, tb=512, compute_dtype=jnp.bfloat16)
    ref = ent_emb_forward_ref(x, params)
    jax.block_until_ready((out_f32, out_bf16, ref))

    assert out_f32.shape == (batch, 1)
    assert out_bf16.shape == (batch, 1)
    assert jnp.allclose(out_f32, ref, rtol=1e-4, atol=1e-5), "f32 path mismatch"
    assert jnp.allclose(out_bf16, ref, rtol=5e-2, atol=3e-2), "bf16 path mismatch"
    print("KERNEL_OK")
</pallas_src>

<mosaic_0001>
module attributes {stable_mosaic.version = 11 : i64} {
  func.func @kernel(%arg0: i32, %arg1: memref<2x128xi32, #tpu.memory_space<vmem>>, %arg2: memref<5x128xf32, #tpu.memory_space<vmem>>, %arg3: memref<32x12xf32, #tpu.memory_space<vmem>>, %arg4: memref<32x5xf32, #tpu.memory_space<vmem>>, %arg5: memref<32x1xf32, #tpu.memory_space<vmem>>, %arg6: memref<16x32xf32, #tpu.memory_space<vmem>>, %arg7: memref<16x1xf32, #tpu.memory_space<vmem>>, %arg8: memref<16x1xf32, #tpu.memory_space<vmem>>, %arg9: memref<1x1xf32, #tpu.memory_space<vmem>>, %arg10: memref<1x128xf32, #tpu.memory_space<vmem>>) attributes {dimension_semantics = [#tpu.dimension_semantics<parallel>], iteration_bounds = array<i64: 2>, scalar_prefetch = 0 : i64, scratch_operands = 0 : i64, tpu.core_type = #tpu.core_type<tc>, window_params = [{transform_indices = @transform_0, window_bounds = array<i64: 2, 128>}, {transform_indices = @transform_1, window_bounds = array<i64: 5, 128>}, {pipeline_mode = #tpu.pipeline_mode<synchronous>, transform_indices = @transform_2, window_bounds = array<i64: 32, 12>}, {pipeline_mode = #tpu.pipeline_mode<synchronous>, transform_indices = @transform_3, window_bounds = array<i64: 32, 5>}, {pipeline_mode = #tpu.pipeline_mode<synchronous>, transform_indices = @transform_4, window_bounds = array<i64: 32, 1>}, {pipeline_mode = #tpu.pipeline_mode<synchronous>, transform_indices = @transform_5, window_bounds = array<i64: 16, 32>}, {pipeline_mode = #tpu.pipeline_mode<synchronous>, transform_indices = @transform_6, window_bounds = array<i64: 16, 1>}, {pipeline_mode = #tpu.pipeline_mode<synchronous>, transform_indices = @transform_7, window_bounds = array<i64: 16, 1>}, {pipeline_mode = #tpu.pipeline_mode<synchronous>, transform_indices = @transform_8, window_bounds = array<i64: 1, 1>}, {transform_indices = @transform_9, window_bounds = array<i64: 1, 128>}]} {
    %0 = tpu.iota {dimensions = array<i32: 0>} : vector<12x128xi32>
    %c0 = arith.constant 0 : index
    %c0_0 = arith.constant 0 : index
    %1 = vector.load %arg1[%c0, %c0_0] : memref<2x128xi32, #tpu.memory_space<vmem>>, vector<1x128xi32>
    %2 = vector.broadcast %1 : vector<1x128xi32> to vector<12x128xi32>
    %3 = arith.cmpi eq, %0, %2 : vector<12x128xi32>
    %c1 = arith.constant 1 : index
    %c0_1 = arith.constant 0 : index
    %4 = vector.load %arg1[%c1, %c0_1] : memref<2x128xi32, #tpu.memory_space<vmem>>, vector<1x128xi32>
    %5 = vector.broadcast %4 : vector<1x128xi32> to vector<12x128xi32>
    %6 = arith.cmpi eq, %0, %5 : vector<12x128xi32>
    %7 = arith.ori %3, %6 : vector<12x128xi1>
    %8 = arith.extui %7 : vector<12x128xi1> to vector<12x128xi32>
    %9 = arith.sitofp %8 : vector<12x128xi32> to vector<12x128xf32>
    %c0_2 = arith.constant 0 : index
    %c0_3 = arith.constant 0 : index
    %10 = vector.load %arg3[%c0_2, %c0_3] : memref<32x12xf32, #tpu.memory_space<vmem>>, vector<32x12xf32>
    %cst = arith.constant dense<0.000000e+00> : vector<32x128xf32>
    %11 = tpu.matmul %10, %9, %cst {dimension_numbers = #tpu.dot_dimension_numbers<[1], [0], [0], [1], [0, 0, 1, 1], [], []>} : vector<32x12xf32>, vector<12x128xf32>, vector<32x128xf32> -> vector<32x128xf32>
    %c0_4 = arith.constant 0 : index
    %c0_5 = arith.constant 0 : index
    %12 = vector.load %arg4[%c0_4, %c0_5] : memref<32x5xf32, #tpu.memory_space<vmem>>, vector<32x5xf32>
    %c0_6 = arith.constant 0 : index
    %c0_7 = arith.constant 0 : index
    %13 = vector.load %arg2[%c0_6, %c0_7] : memref<5x128xf32, #tpu.memory_space<vmem>>, vector<5x128xf32>
    %cst_8 = arith.constant dense<0.000000e+00> : vector<32x128xf32>
    %14 = tpu.matmul %12, %13, %cst_8 {dimension_numbers = #tpu.dot_dimension_numbers<[1], [0], [0], [1], [0, 0, 1, 1], [], []>} : vector<32x5xf32>, vector<5x128xf32>, vector<32x128xf32> -> vector<32x128xf32>
    %15 = arith.addf %11, %14 : vector<32x128xf32>
    %c0_9 = arith.constant 0 : index
    %c0_10 = arith.constant 0 : index
    %16 = vector.load %arg5[%c0_9, %c0_10] : memref<32x1xf32, #tpu.memory_space<vmem>>, vector<32x1xf32>
    %17 = vector.broadcast %16 : vector<32x1xf32> to vector<32x128xf32>
    %18 = arith.addf %15, %17 : vector<32x128xf32>
    %cst_11 = arith.constant 0.000000e+00 : f32
    %19 = vector.broadcast %cst_11 : f32 to vector<32x128xf32>
    %20 = arith.maximumf %18, %19 : vector<32x128xf32>
    %c0_12 = arith.constant 0 : index
    %c0_13 = arith.constant 0 : index
    %21 = vector.load %arg6[%c0_12, %c0_13] : memref<16x32xf32, #tpu.memory_space<vmem>>, vector<16x32xf32>
    %cst_14 = arith.constant dense<0.000000e+00> : vector<16x128xf32>
    %22 = tpu.matmul %21, %20, %cst_14 {dimension_numbers = #tpu.dot_dimension_numbers<[1], [0], [0], [1], [0, 0, 1, 1], [], []>} : vector<16x32xf32>, vector<32x128xf32>, vector<16x128xf32> -> vector<16x128xf32>
    %c0_15 = arith.constant 0 : index
    %c0_16 = arith.constant 0 : index
    %23 = vector.load %arg7[%c0_15, %c0_16] : memref<16x1xf32, #tpu.memory_space<vmem>>, vector<16x1xf32>
    %24 = vector.broadcast %23 : vector<16x1xf32> to vector<16x128xf32>
    %25 = arith.addf %22, %24 : vector<16x128xf32>
    %cst_17 = arith.constant 0.000000e+00 : f32
    %26 = vector.broadcast %cst_17 : f32 to vector<16x128xf32>
    %27 = arith.maximumf %25, %26 : vector<16x128xf32>
    %c0_18 = arith.constant 0 : index
    %c0_19 = arith.constant 0 : index
    %28 = vector.load %arg8[%c0_18, %c0_19] : memref<16x1xf32, #tpu.memory_space<vmem>>, vector<16x1xf32>
    %29 = vector.broadcast %28 : vector<16x1xf32> to vector<16x128xf32>
    %30 = arith.mulf %27, %29 : vector<16x128xf32>
    %cst_20 = arith.constant dense<0.000000e+00> : vector<128xf32>
    %31 = vector.multi_reduction <add>, %30, %cst_20 [0] : vector<16x128xf32> to vector<128xf32>
    %32 = vector.shape_cast %31 : vector<128xf32> to vector<1x128xf32>
    %c0_21 = arith.constant 0 : index
    %c0_22 = arith.constant 0 : index
    %33 = vector.load %arg9[%c0_21, %c0_22] : memref<1x1xf32, #tpu.memory_space<vmem>>, vector<1x1xf32>
    %34 = vector.broadcast %33 : vector<1x1xf32> to vector<1x128xf32>
    %35 = arith.addf %32, %34 : vector<1x128xf32>
    %c0_23 = arith.constant 0 : index
    %c0_24 = arith.constant 0 : index
    %36 = vector.load %arg10[%c0_23, %c0_24] : memref<1x128xf32, #tpu.memory_space<vmem>>, vector<1x128xf32>
    tpu.vector_store %arg10[%c0_23, %c0_24], %35 {strides = array<i32>} : memref<1x128xf32, #tpu.memory_space<vmem>>, vector<1x128xf32>,
    return
  }
  func.func @transform_0(%arg0: i32) -> (i32, i32) {
    %c0_i32 = arith.constant 0 : i32
    %c0_i32_0 = arith.constant 0 : i32
    return %c0_i32, %arg0 : i32, i32
  }
  func.func @transform_1(%arg0: i32) -> (i32, i32) {
    %c0_i32 = arith.constant 0 : i32
    %c0_i32_0 = arith.constant 0 : i32
    return %c0_i32, %arg0 : i32, i32
  }
  func.func @transform_2(%arg0: i32) -> (i32, i32) {
    %c0_i32 = arith.constant 0 : i32
    %c0_i32_0 = arith.constant 0 : i32
    %c0_i32_1 = arith.constant 0 : i32
    return %c0_i32, %c0_i32_0 : i32, i32
  }
  func.func @transform_3(%arg0: i32) -> (i32, i32) {
    %c0_i32 = arith.constant 0 : i32
    %c0_i32_0 = arith.constant 0 : i32
    %c0_i32_1 = arith.constant 0 : i32
    return %c0_i32, %c0_i32_0 : i32, i32
  }
  func.func @transform_4(%arg0: i32) -> (i32, i32) {
    %c0_i32 = arith.constant 0 : i32
    %c0_i32_0 = arith.constant 0 : i32
    %c0_i32_1 = arith.constant 0 : i32
    return %c0_i32, %c0_i32_0 : i32, i32
  }
  func.func @transform_5(%arg0: i32) -> (i32, i32) {
    %c0_i32 = arith.constant 0 : i32
    %c0_i32_0 = arith.constant 0 : i32
    %c0_i32_1 = arith.constant 0 : i32
    return %c0_i32, %c0_i32_0 : i32, i32
  }
  func.func @transform_6(%arg0: i32) -> (i32, i32) {
    %c0_i32 = arith.constant 0 : i32
    %c0_i32_0 = arith.constant 0 : i32
    %c0_i32_1 = arith.constant 0 : i32
    return %c0_i32, %c0_i32_0 : i32, i32
  }
  func.func @transform_7(%arg0: i32) -> (i32, i32) {
    %c0_i32 = arith.constant 0 : i32
    %c0_i32_0 = arith.constant 0 : i32
    %c0_i32_1 = arith.constant 0 : i32
    return %c0_i32, %c0_i32_0 : i32, i32
  }
  func.func @transform_8(%arg0: i32) -> (i32, i32) {
    %c0_i32 = arith.constant 0 : i32
    %c0_i32_0 = arith.constant 0 : i32
    %c0_i32_1 = arith.constant 0 : i32
    return %c0_i32, %c0_i32_0 : i32, i32
  }
  func.func @transform_9(%arg0: i32) -> (i32, i32) {
    %c0_i32 = arith.constant 0 : i32
    %c0_i32_0 = arith.constant 0 : i32
    return %c0_i32, %arg0 : i32, i32
  }
}

</mosaic_0001>

<llo_original>
// kernel: tpu_custom_call.1
$region0: #{tpu_custom_call.1}
  #allocation0 [shape = 'u32[]', space=smem, size = 0x4, offset = 0x4, fixed_abs, tag = 'smem constant byte address 0x4 - core index']
  #allocation1 [shape = 'u32[144,128]{1,0:T(1,128)}', space=vmem, size = 0x12000, scoped, tag = 'internal scratch']
  #allocation2 [shape = 'f32[1,1]{1,0:T(1,128)S(1)}', space=vmem, size = 0x200, scoped, tag = 'scoped memory for tpu_custom_call.1']
  %s0 = inlined_call_operand.vmem [shape: s32[2,256], index: 0, kind: input, shape index: {}]
  %s1 = inlined_call_operand.vmem [shape: f32[5,256], index: 1, kind: input, shape index: {}]
  %s2 = inlined_call_operand.vmem [shape: f32[32,12], index: 2, kind: input, shape index: {}]
  %s3 = inlined_call_operand.vmem [shape: f32[32,5], index: 3, kind: input, shape index: {}]
  %s4 = inlined_call_operand.vmem [shape: f32[32,1], index: 4, kind: input, shape index: {}]
  %s5 = inlined_call_operand.vmem [shape: f32[16,32], index: 5, kind: input, shape index: {}]
  %s6 = inlined_call_operand.vmem [shape: f32[16,1], index: 6, kind: input, shape index: {}]
  %s7 = inlined_call_operand.vmem [shape: f32[16,1], index: 7, kind: input, shape index: {}]
  %s8 = inlined_call_operand.<no memory space> [shape: f32[1,1], index: 8, kind: input, shape index: {}]
  %s9 = inlined_call_operand.hbm [shape: f32[1,256], index: 9, kind: output, shape index: {}]
  %s10 = sld [smem:[#allocation0]]
  $region69: #{tpu_custom_call.1} parent=0
    _
  %s12 = ssub.s32 1, %s10
  %s13 = scalar_select 0, %s12, %s10
  %v14 = vstv %s8
  %15 = vst [vmem:[#allocation2] sm:$0x1] %v14
  $region1: #{tpu_custom_call.1} parent=0
    #allocation3 [shape = 'u8[1024]{0}', space=vmem, size = 0x400, scoped, tag = 'output window, operand 0']
    #allocation4 [shape = 's32[2]{0}', space=sflag, size = 0x8, scoped, tag = 'scoped memory for tpu_custom_call.1']
    %16 = vsyncpa [#allocation4], 0
    %s17 = scalar_lea.sflag [#allocation4], 1
    %18 = vsyncpa %s17, 0
    loop: start=0, step=1, limit=4
    $region2: #{tpu_custom_call.1} parent=1 // loop_pre_header
      _
    $region3: #{tpu_custom_call.1} parent=1 // loop_header
      %s20 = sphi 0, %s24
      %p21 = scmp.ge.s32.totalorder %s20, 4
      %s30 = sphi 0, %s32
      %s33 = sphi 0, %s30
      %s34 = sphi 0, %s33
      %s50 = sphi 0, %s34
      %s56 = sphi 0, %s58
      %s59 = sphi 0, %s56
      %s60 = sphi 0, %s59
      %s76 = sphi 0, %s60
      %s80 = sphi 0, %s80
      %s82 = sphi 0, %s80
      %s83 = sphi 0, %s82
      %s97 = sphi 0, %s83
      %s101 = sphi 0, %s101
      %s103 = sphi 0, %s101
      %s104 = sphi 0, %s103
      %s118 = sphi 0, %s104
      %s122 = sphi 0, %s122
      %s124 = sphi 0, %s122
      %s125 = sphi 0, %s124
      %s139 = sphi 0, %s125
      %s143 = sphi 0, %s143
      %s145 = sphi 0, %s143
      %s146 = sphi 0, %s145
      %s160 = sphi 0, %s146
      %s164 = sphi 0, %s164
      %s166 = sphi 0, %s164
      %s167 = sphi 0, %s166
      %s181 = sphi 0, %s167
      %s185 = sphi 0, %s185
      %s187 = sphi 0, %s185
      %s188 = sphi 0, %s187
      %s202 = sphi 0, %s188
      %s206 = sphi 0, %s206
      %s208 = sphi 0, %s206
      %s209 = sphi 0, %s208
      %s223 = sphi 0, %s209
      %s229 = sphi 0, %s231
      %s232 = sphi 0, %s229
      %s233 = sphi 0, %s232
      %s249 = sphi 0, %s233
    $region4: #{tpu_custom_call.1} parent=1 // loop_header_branch
      %23 = sbr.rel (%p21) target = $region8
    $region5: #{tpu_custom_call.1} parent=1 // loop_body
      %s25 = ssub.s32 %s20, 1
      %s26 = ssub.s32 %s20, 2
      %s27 = sadd.s32 %s20, 1
      %s28 = ssub.s32 %s20, %s27
      %p29 = scmp.eq.s32.totalorder %s28, 0
      %s31 = sadd.s32 %s30, 1
      %s32 = scalar_select %p29, %s30, %s31
      %p35 = pneg %p29
      %p36 = scmp.eq.s32.totalorder %s20, 1
      %p37 = por %p35, %p36
      %p38 = scmp.ne.s32.totalorder %s30, %s33
      %p39 = scmp.eq.s32.totalorder %s20, 0
      %p40 = por %p38, %p39
      %p41 = scmp.ne.s32.totalorder %s30, %s33
      %p42 = scmp.eq.s32.totalorder %s25, 1
      %p43 = por %p41, %p42
      %p44 = scmp.ne.s32.totalorder %s33, %s34
      %p45 = scmp.eq.s32.totalorder %s25, 0
      %p46 = por %p44, %p45
      %p47 = scmp.ne.s32.totalorder %s33, %s34
      %p48 = scmp.eq.s32.totalorder %s26, 1
      %p49 = por %p47, %p48
      %p51 = scmp.ne.s32.totalorder %s34, %s50
      %p52 = scmp.eq.s32.totalorder %s26, 0
      %p53 = por %p51, %p52
      %s54 = ssub.s32 %s20, %s27
      %p55 = scmp.eq.s32.totalorder %s54, 0
      %s57 = sadd.s32 %s56, 1
      %s58 = scalar_select %p55, %s56, %s57
      %p61 = pneg %p55
      %p62 = scmp.eq.s32.totalorder %s20, 1
      %p63 = por %p61, %p62
      %p64 = scmp.ne.s32.totalorder %s56, %s59
      %p65 = scmp.eq.s32.totalorder %s20, 0
      %p66 = por %p64, %p65
      %p67 = scmp.ne.s32.totalorder %s56, %s59
      %p68 = scmp.eq.s32.totalorder %s25, 1
      %p69 = por %p67, %p68
      %p70 = scmp.ne.s32.totalorder %s59, %s60
      %p71 = scmp.eq.s32.totalorder %s25, 0
      %p72 = por %p70, %p71
      %p73 = scmp.ne.s32.totalorder %s59, %s60
      %p74 = scmp.eq.s32.totalorder %s26, 1
      %p75 = por %p73, %p74
      %p77 = scmp.ne.s32.totalorder %s60, %s76
      %p78 = scmp.eq.s32.totalorder %s26, 0
      %p79 = por %p77, %p78
      %s81 = sadd.s32 %s80, 1
      %p84 = scmp.eq.s32.totalorder %s20, 1
      %p85 = scmp.ne.s32.totalorder %s80, %s82
      %p86 = scmp.eq.s32.totalorder %s20, 0
      %p87 = por %p85, %p86
      %p88 = scmp.ne.s32.totalorder %s80, %s82
      %p89 = scmp.eq.s32.totalorder %s25, 1
      %p90 = por %p88, %p89
      %p91 = scmp.ne.s32.totalorder %s82, %s83
      %p92 = scmp.eq.s32.totalorder %s25, 0
      %p93 = por %p91, %p92
      %p94 = scmp.ne.s32.totalorder %s82, %s83
      %p95 = scmp.eq.s32.totalorder %s26, 1
      %p96 = por %p94, %p95
      %p98 = scmp.ne.s32.totalorder %s83, %s97
      %p99 = scmp.eq.s32.totalorder %s26, 0
      %p100 = por %p98, %p99
      %s102 = sadd.s32 %s101, 1
      %p105 = scmp.eq.s32.totalorder %s20, 1
      %p106 = scmp.ne.s32.totalorder %s101, %s103
      %p107 = scmp.eq.s32.totalorder %s20, 0
      %p108 = por %p106, %p107
      %p109 = scmp.ne.s32.totalorder %s101, %s103
      %p110 = scmp.eq.s32.totalorder %s25, 1
      %p111 = por %p109, %p110
      %p112 = scmp.ne.s32.totalorder %s103, %s104
      %p113 = scmp.eq.s32.totalorder %s25, 0
      %p114 = por %p112, %p113
      %p115 = scmp.ne.s32.totalorder %s103, %s104
      %p116 = scmp.eq.s32.totalorder %s26, 1
      %p117 = por %p115, %p116
      %p119 = scmp.ne.s32.totalorder %s104, %s118
      %p120 = scmp.eq.s32.totalorder %s26, 0
      %p121 = por %p119, %p120
      %s123 = sadd.s32 %s122, 1
      %p126 = scmp.eq.s32.totalorder %s20, 1
      %p127 = scmp.ne.s32.totalorder %s122, %s124
      %p128 = scmp.eq.s32.totalorder %s20, 0
      %p129 = por %p127, %p128
      %p130 = scmp.ne.s32.totalorder %s122, %s124
      %p131 = scmp.eq.s32.totalorder %s25, 1
      %p132 = por %p130, %p131
      %p133 = scmp.ne.s32.totalorder %s124, %s125
      %p134 = scmp.eq.s32.totalorder %s25, 0
      %p135 = por %p133, %p134
      %p136 = scmp.ne.s32.totalorder %s124, %s125
      %p137 = scmp.eq.s32.totalorder %s26, 1
      %p138 = por %p136, %p137
      %p140 = scmp.ne.s32.totalorder %s125, %s139
      %p141 = scmp.eq.s32.totalorder %s26, 0
      %p142 = por %p140, %p141
      %s144 = sadd.s32 %s143, 1
      %p147 = scmp.eq.s32.totalorder %s20, 1
      %p148 = scmp.ne.s32.totalorder %s143, %s145
      %p149 = scmp.eq.s32.totalorder %s20, 0
      %p150 = por %p148, %p149
      %p151 = scmp.ne.s32.totalorder %s143, %s145
      %p152 = scmp.eq.s32.totalorder %s25, 1
      %p153 = por %p151, %p152
      %p154 = scmp.ne.s32.totalorder %s145, %s146
      %p155 = scmp.eq.s32.totalorder %s25, 0
      %p156 = por %p154, %p155
      %p157 = scmp.ne.s32.totalorder %s145, %s146
      %p158 = scmp.eq.s32.totalorder %s26, 1
      %p159 = por %p157, %p158
      %p161 = scmp.ne.s32.totalorder %s146, %s160
      %p162 = scmp.eq.s32.totalorder %s26, 0
      %p163 = por %p161, %p162
      %s165 = sadd.s32 %s164, 1
      %p168 = scmp.eq.s32.totalorder %s20, 1
      %p169 = scmp.ne.s32.totalorder %s164, %s166
      %p170 = scmp.eq.s32.totalorder %s20, 0
      %p171 = por %p169, %p170
      %p172 = scmp.ne.s32.totalorder %s164, %s166
      %p173 = scmp.eq.s32.totalorder %s25, 1
      %p174 = por %p172, %p173
      %p175 = scmp.ne.s32.totalorder %s166, %s167
      %p176 = scmp.eq.s32.totalorder %s25, 0
      %p177 = por %p175, %p176
      %p178 = scmp.ne.s32.totalorder %s166, %s167
      %p179 = scmp.eq.s32.totalorder %s26, 1
      %p180 = por %p178, %p179
      %p182 = scmp.ne.s32.totalorder %s167, %s181
      %p183 = scmp.eq.s32.totalorder %s26, 0
      %p184 = por %p182, %p183
      %s186 = sadd.s32 %s185, 1
      %p189 = scmp.eq.s32.totalorder %s20, 1
      %p190 = scmp.ne.s32.totalorder %s185, %s187
      %p191 = scmp.eq.s32.totalorder %s20, 0
      %p192 = por %p190, %p191
      %p193 = scmp.ne.s32.totalorder %s185, %s187
      %p194 = scmp.eq.s32.totalorder %s25, 1
      %p195 = por %p193, %p194
      %p196 = scmp.ne.s32.totalorder %s187, %s188
      %p197 = scmp.eq.s32.totalorder %s25, 0
      %p198 = por %p196, %p197
      %p199 = scmp.ne.s32.totalorder %s187, %s188
      %p200 = scmp.eq.s32.totalorder %s26, 1
      %p201 = por %p199, %p200
      %p203 = scmp.ne.s32.totalorder %s188, %s202
      %p204 = scmp.eq.s32.totalorder %s26, 0
      %p205 = por %p203, %p204
      %s207 = sadd.s32 %s206, 1
      %p210 = scmp.eq.s32.totalorder %s20, 1
      %p211 = scmp.ne.s32.totalorder %s206, %s208
      %p212 = scmp.eq.s32.totalorder %s20, 0
      %p213 = por %p211, %p212
      %p214 = scmp.ne.s32.totalorder %s206, %s208
      %p215 = scmp.eq.s32.totalorder %s25, 1
      %p216 = por %p214, %p215
      %p217 = scmp.ne.s32.totalorder %s208, %s209
      %p218 = scmp.eq.s32.totalorder %s25, 0
      %p219 = por %p217, %p218
      %p220 = scmp.ne.s32.totalorder %s208, %s209
      %p221 = scmp.eq.s32.totalorder %s26, 1
      %p222 = por %p220, %p221
      %p224 = scmp.ne.s32.totalorder %s209, %s223
      %p225 = scmp.eq.s32.totalorder %s26, 0
      %p226 = por %p224, %p225
      %s227 = ssub.s32 %s20, %s27
      %p228 = scmp.eq.s32.totalorder %s227, 0
      %s230 = sadd.s32 %s229, 1
      %s231 = scalar_select %p228, %s229, %s230
      %p234 = pneg %p228
      %p235 = scmp.eq.s32.totalorder %s20, 1
      %p236 = por %p234, %p235
      %p237 = scmp.ne.s32.totalorder %s229, %s232
      %p238 = scmp.eq.s32.totalorder %s20, 0
      %p239 = por %p237, %p238
      %p240 = scmp.ne.s32.totalorder %s229, %s232
      %p241 = scmp.eq.s32.totalorder %s25, 1
      %p242 = por %p240, %p241
      %p243 = scmp.ne.s32.totalorder %s232, %s233
      %p244 = scmp.eq.s32.totalorder %s25, 0
      %p245 = por %p243, %p244
      %p246 = scmp.ne.s32.totalorder %s232, %s233
      %p247 = scmp.eq.s32.totalorder %s26, 1
      %p248 = por %p246, %p247
      %p250 = scmp.ne.s32.totalorder %s233, %s249
      %p251 = scmp.eq.s32.totalorder %s26, 0
      %p252 = por %p250, %p251
      %p253 = scmp.le.s32.totalorder 1, %s20
      %p254 = scmp.lt.s32.totalorder %s20, 3
      %p255 = pnand %p253, %p254
      %p256 = pneg %p255
      // Predicated region
      $region9: #{tpu_custom_call.1} parent=5 // pred_check
        _
      $region10: #{tpu_custom_call.1} parent=5 // pred_check_branch
        %258 = sbr.rel (%p255) target = $region12
      $region11: #{tpu_custom_call.1} parent=5 // pred_region
        %s259 = ssub.s32 %s20, 1
        // Predicated region
        $region13: #{tpu_custom_call.1} parent=11 // pred_check
          %p260 = pneg %p93
        $region14: #{tpu_custom_call.1} parent=11 // pred_check_branch
          %262 = sbr.rel (%p260) target = $region16
        $region15: #{tpu_custom_call.1} parent=11 // pred_region
          _
        $region16: #{tpu_custom_call.1} parent=11 // pred_fallthru
          _
        // Predicated region
        $region17: #{tpu_custom_call.1} parent=11 // pred_check
          %p263 = pneg %p114
        $region18: #{tpu_custom_call.1} parent=11 // pred_check_branch
          %265 = sbr.rel (%p263) target = $region20
        $region19: #{tpu_custom_call.1} parent=11 // pred_region
          _
        $region20: #{tpu_custom_call.1} parent=11 // pred_fallthru
          _
        // Predicated region
        $region21: #{tpu_custom_call.1} parent=11 // pred_check
          %p266 = pneg %p135
        $region22: #{tpu_custom_call.1} parent=11 // pred_check_branch
          %268 = sbr.rel (%p266) target = $region24
        $region23: #{tpu_custom_call.1} parent=11 // pred_region
          _
        $region24: #{tpu_custom_call.1} parent=11 // pred_fallthru
          _
        // Predicated region
        $region25: #{tpu_custom_call.1} parent=11 // pred_check
          %p269 = pneg %p156
        $region26: #{tpu_custom_call.1} parent=11 // pred_check_branch
          %271 = sbr.rel (%p269) target = $region28
        $region27: #{tpu_custom_call.1} parent=11 // pred_region
          _
        $region28: #{tpu_custom_call.1} parent=11 // pred_fallthru
          _
        // Predicated region
        $region29: #{tpu_custom_call.1} parent=11 // pred_check
          %p272 = pneg %p177
        $region30: #{tpu_custom_call.1} parent=11 // pred_check_branch
          %274 = sbr.rel (%p272) target = $region32
        $region31: #{tpu_custom_call.1} parent=11 // pred_region
          _
        $region32: #{tpu_custom_call.1} parent=11 // pred_fallthru
          _
        // Predicated region
        $region33: #{tpu_custom_call.1} parent=11 // pred_check
          %p275 = pneg %p198
        $region34: #{tpu_custom_call.1} parent=11 // pred_check_branch
          %277 = sbr.rel (%p275) target = $region36
        $region35: #{tpu_custom_call.1} parent=11 // pred_region
          _
        $region36: #{tpu_custom_call.1} parent=11 // pred_fallthru
          _
        // Predicated region
        $region37: #{tpu_custom_call.1} parent=11 // pred_check
          %p278 = pneg %p219
        $region38: #{tpu_custom_call.1} parent=11 // pred_check_branch
          %280 = sbr.rel (%p278) target = $region40
        $region39: #{tpu_custom_call.1} parent=11 // pred_region
          _
        $region40: #{tpu_custom_call.1} parent=11 // pred_fallthru
          _
      $region12: #{tpu_custom_call.1} parent=5 // pred_fallthru
        _
      %p281 = scmp.lt.s32.totalorder %s20, 2
      // Predicated region
      $region41: #{tpu_custom_call.1} parent=5 // pred_check
        %p282 = pneg %p281
      $region42: #{tpu_custom_call.1} parent=5 // pred_check_branch
        %284 = sbr.rel (%p282) target = $region44
      $region43: #{tpu_custom_call.1} parent=5 // pred_region
        // Predicated region
        $region45: #{tpu_custom_call.1} parent=43 // pred_check
          %p285 = pneg %p40
        $region46: #{tpu_custom_call.1} parent=43 // pred_check_branch
          %287 = sbr.rel (%p285) target = $region48
        $region47: #{tpu_custom_call.1} parent=43 // pred_region
          %p288 = scmp.lt.s32.totalorder %s20, 1
          %s289 = scalar_select %p288, %s20, 1
          %s290 = smul.addr %s289, 2
          %s291 = scalar_lea.vmem %s0, %s290
        $region48: #{tpu_custom_call.1} parent=43 // pred_fallthru
          _
        // Predicated region
        $region49: #{tpu_custom_call.1} parent=43 // pred_check
          %p292 = pneg %p66
        $region50: #{tpu_custom_call.1} parent=43 // pred_check_branch
          %294 = sbr.rel (%p292) target = $region52
        $region51: #{tpu_custom_call.1} parent=43 // pred_region
          %p295 = scmp.lt.s32.totalorder %s20, 1
          %s296 = scalar_select %p295, %s20, 1
          %s297 = smul.addr %s296, 8
          %s298 = scalar_lea.vmem %s1, %s297
        $region52: #{tpu_custom_call.1} parent=43 // pred_fallthru
          _
      $region44: #{tpu_custom_call.1} parent=5 // pred_fallthru
        _
      %p299 = scmp.le.s32.totalorder 1, %s20
      %p300 = scmp.lt.s32.totalorder %s20, 3
      %p301 = pnand %p299, %p300
      %p302 = pneg %p301
      // Predicated region
      $region53: #{tpu_custom_call.1} parent=5 // pred_check
        _
      $region54: #{tpu_custom_call.1} parent=5 // pred_check_branch
        %304 = sbr.rel (%p301) target = $region56
      $region55: #{tpu_custom_call.1} parent=5 // pred_region
        %s305 = ssub.s32 %s20, 1
        %p306 = scmp.lt.s32.totalorder %s25, 1
        %s307 = scalar_select %p306, %s25, 1
        %s308 = smul.addr %s307, 2
        %s309 = scalar_lea.vmem %s0, %s308
        %p310 = pneg %p46
        %p311 = pneg %p43
        %p312 = scmp.lt.s32.totalorder %s25, 1
        %s313 = scalar_select %p312, %s25, 1
        %s314 = smul.addr %s313, 8
        %s315 = scalar_lea.vmem %s1, %s314
        %p316 = pneg %p72
        %p317 = pneg %p69
        %p318 = pneg %p93
        %p319 = pneg %p90
        %p320 = pneg %p114
        %p321 = pneg %p111
        %p322 = pneg %p135
        %p323 = pneg %p132
        %p324 = pneg %p156
        %p325 = pneg %p153
        %p326 = pneg %p177
        %p327 = pneg %p174
        %p328 = pneg %p198
        %p329 = pneg %p195
        %p330 = pneg %p219
        %p331 = pneg %p216
        %p332 = pneg %p245
        %p333 = pneg %p242
        %s334 = sand.u32 %s232, 1
        %s335 = scalar_lea.sflag [#allocation4], %s334
        %s336 = sand.u32 %s232, 1
        %s337 = scalar_lea.vmem [#allocation3], %s336
        %p338 = scmp.lt.s32.totalorder %s25, 1
        %s339 = scalar_select %p338, %s25, 1
        %s340 = smul.addr %s339, 2
        %s341 = scalar_lea.vmem %s0, %s340
        %p342 = scmp.lt.s32.totalorder %s25, 1
        %s343 = scalar_select %p342, %s25, 1
        %s344 = smul.addr %s343, 8
        %s345 = scalar_lea.vmem %s1, %s344
        %v346 = vlaneseq
        %v347 = vshrl.u32 %v346, 7
        %v348 = vadd.s32 %v347, 8
        %v349 = vld [vmem:[%s341] sm:$0x1]
        %v350 = vlaneseq
        %v351 = vshrl.u32 %v350, 7
        %v352 = vsub.s32 0, %v351
        %v353 = vrot.slane %v349, %v352
        %vm354 = vcmp.eq.s32.totalorder %v347, %v353
        %vm355 = vcmp.eq.s32.totalorder %v348, %v353
        %v356 = vld [vmem:[%s341 + $0x1] sm:$0x1]
        %v357 = vlaneseq
        %v358 = vshrl.u32 %v357, 7
        %v359 = vsub.s32 0, %v358
        %v360 = vrot.slane %v356, %v359
        %vm361 = vcmp.eq.s32.totalorder %v347, %v360
        %vm362 = vcmp.eq.s32.totalorder %v348, %v360
        %vm363 = vmor %vm354, %vm361
        %vm364 = vmor %vm355, %vm362
        %v365 = vsel %vm363, 1, 0
        %v366 = vsel %vm364, 1, 0
        %v367 = vcvt.s32.f32 %v365
        %v368 = vcvt.s32.f32 %v366
        %v369 = vld [vmem:[%s2] sm:$0xff]
        %v370 = vld [vmem:[%s2 + $0x8] sm:$0xff]
        %v371 = vld [vmem:[%s2 + $0x10] sm:$0xff]
        %v372 = vld [vmem:[%s2 + $0x18] sm:$0xff]
        %v373 = vld [vmem:[%s3] sm:$0xff]
        %v374 = vld [vmem:[%s3 + $0x8] sm:$0xff]
        %v375 = vld [vmem:[%s3 + $0x10] sm:$0xff]
        %v376 = vld [vmem:[%s3 + $0x18] sm:$0xff]
        %v377 = vld [vmem:[%s345] sm:$0x1f]
        %vm378 = vcmask 39936
        %v380 = vsel %vm378, %v373, 0
        %v383 = vsel %vm378, %v374, 0
        %v386 = vsel %vm378, %v375, 0
        %v389 = vsel %vm378, %v376, 0
        %vm391 = vcmask 1044480
        %v393 = vsel %vm391, %v377, 0
        %395 = vmatprep.subr.mxu0 0.0
        %396 = vmatpush1.msra.mxu0 %v393
        %397 = vmatprep.subr.mxu0 0.0
        %398 = vmatpush1.msra.mxu0 0.0
        %399 = vmatprep.subr.mxu0 0.0
        %400 = vmatpush1.msra.mxu0 0.0
        %401 = vmatprep.subr.mxu0 0.0
        %402 = vmatpush1.msra.mxu0 0.0
        %403 = vmatprep.subr.mxu0 0.0
        %404 = vmatpush1.msra.mxu0 0.0
        %405 = vmatprep.subr.mxu0 0.0
        %406 = vmatpush1.msra.mxu0 0.0
        %407 = vmatprep.subr.mxu0 0.0
        %408 = vmatpush1.msra.mxu0 0.0
        %409 = vmatprep.subr.mxu0 0.0
        %410 = vmatpush1.msra.mxu0 0.0
        %411 = vmatprep.subr.mxu0 0.0
        %412 = vmatpush1.msra.mxu0 0.0
        %413 = vmatprep.subr.mxu0 0.0
        %414 = vmatpush1.msra.mxu0 0.0
        %415 = vmatprep.subr.mxu0 0.0
        %416 = vmatpush1.msra.mxu0 0.0
        %417 = vmatprep.subr.mxu0 0.0
        %418 = vmatpush1.msra.mxu0 0.0
        %419 = vmatprep.subr.mxu0 0.0
        %420 = vmatpush1.msra.mxu0 0.0
        %421 = vmatprep.subr.mxu0 0.0
        %422 = vmatpush1.msra.mxu0 0.0
        %423 = vmatprep.subr.mxu0 0.0
        %424 = vmatpush1.msra.mxu0 0.0
        %425 = vmatprep.subr.mxu0 0.0
        %426 = vmatpush1.msra.mxu0 0.0
        %427 = vmatprep.subr.mxu0 0.0
        %428 = vmatpush1.msra.mxu0 0.0
        %429 = vmatprep.subr.mxu0 0.0
        %430 = vmatpush1.msra.mxu0 0.0
        %431 = vmatprep.subr.mxu0 0.0
        %432 = vmatpush1.msra.mxu0 0.0
        %433 = vmatprep.subr.mxu0 0.0
        %434 = vmatpush1.msra.mxu0 0.0
        %435 = vmatprep.subr.mxu0 0.0
        %436 = vmatpush1.msra.mxu0 0.0
        %437 = vmatprep.subr.mxu0 0.0
        %438 = vmatpush1.msra.mxu0 0.0
        %439 = vmatprep.subr.mxu0 0.0
        %440 = vmatpush1.msra.mxu0 0.0
        %441 = vmatprep.subr.mxu0 0.0
        %442 = vmatpush1.msra.mxu0 0.0
        %443 = vmatprep.subr.mxu0 0.0
        %444 = vmatpush1.msra.mxu0 0.0
        %445 = vmatprep.subr.mxu0 0.0
        %446 = vmatpush1.msra.mxu0 0.0
        %447 = vmatprep.subr.mxu0 0.0
        %448 = vmatpush1.msra.mxu0 0.0
        %449 = vmatprep.subr.mxu0 0.0
        %450 = vmatpush1.msra.mxu0 0.0
        %451 = vmatprep.subr.mxu0 0.0
        %452 = vmatpush1.msra.mxu0 0.0
        %453 = vmatprep.subr.mxu0 0.0
        %454 = vmatpush1.msra.mxu0 0.0
        %455 = vmatprep.subr.mxu0 0.0
        %456 = vmatpush1.msra.mxu0 0.0
        %457 = vmatprep.subr.mxu0 0.0
        %458 = vmatpush1.msra.mxu0 0.0
        %459 = vmatprep.mubr.f32.mxu0 0.0
        %460 = vmatmul.mubr.f32.gmra.mrb[0].mxu0 %v380
        %v461 = vpop.f32.mrb[0].mxu0
        %v462 = vadd.f32 0.0, %v461
        %v463 = vpop.f32.mrb[0].mxu0
        %464 = vmatprep.mubr.f32.mxu0 0.0
        %465 = vmatmul.mubr.f32.gmra.mrb[0].mxu0 %v383
        %v466 = vpop.f32.mrb[0].mxu0
        %v467 = vadd.f32 0.0, %v466
        %v468 = vpop.f32.mrb[0].mxu0
        %469 = vmatprep.mubr.f32.mxu0 0.0
        %470 = vmatmul.mubr.f32.gmra.mrb[0].mxu0 %v386
        %v471 = vpop.f32.mrb[0].mxu0
        %v472 = vadd.f32 0.0, %v471
        %v473 = vpop.f32.mrb[0].mxu0
        %474 = vmatprep.mubr.f32.mxu0 0.0
        %475 = vmatmul.mubr.f32.gmra.mrb[0].mxu0 %v389
        %v476 = vpop.f32.mrb[0].mxu0
        %v477 = vadd.f32 0.0, %v476
        %v478 = vpop.f32.mrb[0].mxu0
        %479 = vdwg.mxu0
        %vm480 = vcmask 97280
        %v482 = vsel %vm480, %v369, 0
        %v485 = vsel %vm480, %v370, 0
        %v488 = vsel %vm480, %v371, 0
        %v491 = vsel %vm480, %v372, 0
        %vm493 = vcmask 1043456
        %v495 = vsel %vm493, %v368, 0
        %497 = vmatprep.subr.mxu0 0.0
        %498 = vmatpush1.msra.mxu0 %v367
        %499 = vmatprep.subr.mxu0 0.0
        %500 = vmatpush1.msra.mxu0 %v495
        %501 = vmatprep.subr.mxu0 0.0
        %502 = vmatpush1.msra.mxu0 0.0
        %503 = vmatprep.subr.mxu0 0.0
        %504 = vmatpush1.msra.mxu0 0.0
        %505 = vmatprep.subr.mxu0 0.0
        %506 = vmatpush1.msra.mxu0 0.0
        %507 = vmatprep.subr.mxu0 0.0
        %508 = vmatpush1.msra.mxu0 0.0
        %509 = vmatprep.subr.mxu0 0.0
        %510 = vmatpush1.msra.mxu0 0.0
        %511 = vmatprep.subr.mxu0 0.0
        %512 = vmatpush1.msra.mxu0 0.0
        %513 = vmatprep.subr.mxu0 0.0
        %514 = vmatpush1.msra.mxu0 0.0
        %515 = vmatprep.subr.mxu0 0.0
        %516 = vmatpush1.msra.mxu0 0.0
        %517 = vmatprep.subr.mxu0 0.0
        %518 = vmatpush1.msra.mxu0 0.0
        %519 = vmatprep.subr.mxu0 0.0
        %520 = vmatpush1.msra.mxu0 0.0
        %521 = vmatprep.subr.mxu0 0.0
        %522 = vmatpush1.msra.mxu0 0.0
        %523 = vmatprep.subr.mxu0 0.0
        %524 = vmatpush1.msra.mxu0 0.0
        %525 = vmatprep.subr.mxu0 0.0
        %526 = vmatpush1.msra.mxu0 0.0
        %527 = vmatprep.subr.mxu0 0.0
        %528 = vmatpush1.msra.mxu0 0.0
        %529 = vmatprep.subr.mxu0 0.0
        %530 = vmatpush1.msra.mxu0 0.0
        %531 = vmatprep.subr.mxu0 0.0
        %532 = vmatpush1.msra.mxu0 0.0
        %533 = vmatprep.subr.mxu0 0.0
        %534 = vmatpush1.msra.mxu0 0.0
        %535 = vmatprep.subr.mxu0 0.0
        %536 = vmatpush1.msra.mxu0 0.0
        %537 = vmatprep.subr.mxu0 0.0
        %538 = vmatpush1.msra.mxu0 0.0
        %539 = vmatprep.subr.mxu0 0.0
        %540 = vmatpush1.msra.mxu0 0.0
        %541 = vmatprep.subr.mxu0 0.0
        %542 = vmatpush1.msra.mxu0 0.0
        %543 = vmatprep.subr.mxu0 0.0
        %544 = vmatpush1.msra.mxu0 0.0
        %545 = vmatprep.subr.mxu0 0.0
        %546 = vmatpush1.msra.mxu0 0.0
        %547 = vmatprep.subr.mxu0 0.0
        %548 = vmatpush1.msra.mxu0 0.0
        %549 = vmatprep.subr.mxu0 0.0
        %550 = vmatpush1.msra.mxu0 0.0
        %551 = vmatprep.subr.mxu0 0.0
        %552 = vmatpush1.msra.mxu0 0.0
        %553 = vmatprep.subr.mxu0 0.0
        %554 = vmatpush1.msra.mxu0 0.0
        %555 = vmatprep.subr.mxu0 0.0
        %556 = vmatpush1.msra.mxu0 0.0
        %557 = vmatprep.subr.mxu0 0.0
        %558 = vmatpush1.msra.mxu0 0.0
        %559 = vmatprep.subr.mxu0 0.0
        %560 = vmatpush1.msra.mxu0 0.0
        %561 = vmatprep.mubr.f32.mxu0 0.0
        %562 = vmatmul.mubr.f32.gmra.mrb[0].mxu0 %v482
        %v563 = vpop.f32.mrb[0].mxu0
        %v564 = vadd.f32 %v462, %v563
        %v565 = vpop.f32.mrb[0].mxu0
        %566 = vmatprep.mubr.f32.mxu0 0.0
        %567 = vmatmul.mubr.f32.gmra.mrb[0].mxu0 %v485
        %v568 = vpop.f32.mrb[0].mxu0
        %v569 = vadd.f32 %v467, %v568
        %v570 = vpop.f32.mrb[0].mxu0
        %571 = vmatprep.mubr.f32.mxu0 0.0
        %572 = vmatmul.mubr.f32.gmra.mrb[0].mxu0 %v488
        %v573 = vpop.f32.mrb[0].mxu0
        %v574 = vadd.f32 %v472, %v573
        %v575 = vpop.f32.mrb[0].mxu0
        %576 = vmatprep.mubr.f32.mxu0 0.0
        %577 = vmatmul.mubr.f32.gmra.mrb[0].mxu0 %v491
        %v578 = vpop.f32.mrb[0].mxu0
        %v579 = vadd.f32 %v477, %v578
        %v580 = vpop.f32.mrb[0].mxu0
        %581 = vdwg.mxu0
        %v582 = vld [vmem:[%s4] sm:$0xff]
        %v583 = vld [vmem:[%s4 + $0x8] sm:$0xff]
        %v584 = vld [vmem:[%s4 + $0x10] sm:$0xff]
        %v585 = vld [vmem:[%s4 + $0x18] sm:$0xff]
        %587 = vset.pattern.permute.xlu0 0
        %588 = vperm.xlu0 %587, %v582
        %v589 = vpop.permute.xlu0 %588
        %592 = vset.pattern.permute.xlu0 0
        %593 = vperm.xlu0 %592, %v583
        %v594 = vpop.permute.xlu0 %593
        %597 = vset.pattern.permute.xlu0 0
        %598 = vperm.xlu0 %597, %v584
        %v599 = vpop.permute.xlu0 %598
        %602 = vset.pattern.permute.xlu0 0
        %603 = vperm.xlu0 %602, %v585
        %v604 = vpop.permute.xlu0 %603
        %v606 = vadd.f32 %v564, %v589
        %v607 = vadd.f32 %v569, %v594
        %v608 = vadd.f32 %v574, %v599
        %v609 = vadd.f32 %v579, %v604
        %v610 = vmax.f32 %v606, 0.0
        %v611 = vmax.f32 %v607, 0.0
        %v612 = vmax.f32 %v608, 0.0
        %v613 = vmax.f32 %v609, 0.0
        %v614 = vld [vmem:[%s5] sm:$0xff]
        %v615 = vld [vmem:[%s5 + $0x8] sm:$0xff]
        %v616 = vld [vmem:[%s6] sm:$0xff]
        %v617 = vld [vmem:[%s6 + $0x8] sm:$0xff]
        %619 = vset.pattern.permute.xlu0 0
        %620 = vperm.xlu0 %619, %v616
        %v621 = vpop.permute.xlu0 %620
        %624 = vset.pattern.permute.xlu0 0
        %625 = vperm.xlu0 %624, %v617
        %v626 = vpop.permute.xlu0 %625
        %vm628 = vcmask 261120
        %v630 = vsel %vm628, %v614, 0
        %v633 = vsel %vm628, %v615, 0
        %635 = vmatprep.subr.mxu0 0.0
        %636 = vmatpush1.msra.mxu0 %v610
        %637 = vmatprep.subr.mxu0 0.0
        %638 = vmatpush1.msra.mxu0 %v611
        %639 = vmatprep.subr.mxu0 0.0
        %640 = vmatpush1.msra.mxu0 %v612
        %641 = vmatprep.subr.mxu0 0.0
        %642 = vmatpush1.msra.mxu0 %v613
        %643 = vmatprep.subr.mxu0 0.0
        %644 = vmatpush1.msra.mxu0 0.0
        %645 = vmatprep.subr.mxu0 0.0
        %646 = vmatpush1.msra.mxu0 0.0
        %647 = vmatprep.subr.mxu0 0.0
        %648 = vmatpush1.msra.mxu0 0.0
        %649 = vmatprep.subr.mxu0 0.0
        %650 = vmatpush1.msra.mxu0 0.0
        %651 = vmatprep.subr.mxu0 0.0
        %652 = vmatpush1.msra.mxu0 0.0
        %653 = vmatprep.subr.mxu0 0.0
        %654 = vmatpush1.msra.mxu0 0.0
        %655 = vmatprep.subr.mxu0 0.0
        %656 = vmatpush1.msra.mxu0 0.0
        %657 = vmatprep.subr.mxu0 0.0
        %658 = vmatpush1.msra.mxu0 0.0
        %659 = vmatprep.subr.mxu0 0.0
        %660 = vmatpush1.msra.mxu0 0.0
        %661 = vmatprep.subr.mxu0 0.0
        %662 = vmatpush1.msra.mxu0 0.0
        %663 = vmatprep.subr.mxu0 0.0
        %664 = vmatpush1.msra.mxu0 0.0
        %665 = vmatprep.subr.mxu0 0.0
        %666 = vmatpush1.msra.mxu0 0.0
        %667 = vmatprep.subr.mxu0 0.0
        %668 = vmatpush1.msra.mxu0 0.0
        %669 = vmatprep.subr.mxu0 0.0
        %670 = vmatpush1.msra.mxu0 0.0
        %671 = vmatprep.subr.mxu0 0.0
        %672 = vmatpush1.msra.mxu0 0.0
        %673 = vmatprep.subr.mxu0 0.0
        %674 = vmatpush1.msra.mxu0 0.0
        %675 = vmatprep.subr.mxu0 0.0
        %676 = vmatpush1.msra.mxu0 0.0
        %677 = vmatprep.subr.mxu0 0.0
        %678 = vmatpush1.msra.mxu0 0.0
        %679 = vmatprep.subr.mxu0 0.0
        %680 = vmatpush1.msra.mxu0 0.0
        %681 = vmatprep.subr.mxu0 0.0
        %682 = vmatpush1.msra.mxu0 0.0
        %683 = vmatprep.subr.mxu0 0.0
        %684 = vmatpush1.msra.mxu0 0.0
        %685 = vmatprep.subr.mxu0 0.0
        %686 = vmatpush1.msra.mxu0 0.0
        %687 = vmatprep.subr.mxu0 0.0
        %688 = vmatpush1.msra.mxu0 0.0
        %689 = vmatprep.subr.mxu0 0.0
        %690 = vmatpush1.msra.mxu0 0.0
        %691 = vmatprep.subr.mxu0 0.0
        %692 = vmatpush1.msra.mxu0 0.0
        %693 = vmatprep.subr.mxu0 0.0
        %694 = vmatpush1.msra.mxu0 0.0
        %695 = vmatprep.subr.mxu0 0.0
        %696 = vmatpush1.msra.mxu0 0.0
        %697 = vmatprep.subr.mxu0 0.0
        %698 = vmatpush1.msra.mxu0 0.0
        %699 = vmatprep.mubr.f32.mxu0 0.0
        %700 = vmatmul.mubr.f32.gmra.mrb[0].mxu0 %v630
        %v701 = vpop.f32.mrb[0].mxu0
        %v702 = vadd.f32 %v621, %v701
        %v703 = vpop.f32.mrb[0].mxu0
        %704 = vmatprep.mubr.f32.mxu0 0.0
        %705 = vmatmul.mubr.f32.gmra.mrb[0].mxu0 %v633
        %v706 = vpop.f32.mrb[0].mxu0
        %v707 = vadd.f32 %v626, %v706
        %v708 = vpop.f32.mrb[0].mxu0
        %709 = vdwg.mxu0
        %v710 = vmax.f32 %v702, 0.0
        %v711 = vmax.f32 %v707, 0.0
        %v712 = vld [vmem:[%s7] sm:$0xff]
        %v713 = vld [vmem:[%s7 + $0x8] sm:$0xff]
        %715 = vset.pattern.permute.xlu0 0
        %716 = vperm.xlu0 %715, %v712
        %v717 = vpop.permute.xlu0 %716
        %720 = vset.pattern.permute.xlu0 0
        %721 = vperm.xlu0 %720, %v713
        %v722 = vpop.permute.xlu0 %721
        %v724 = vmul.f32 %v710, %v717
        %v725 = vmul.f32 %v711, %v722
        %v726 = vadd.f32 %v724, %v725
        %v727 = vrot.slane %v726, 4
        %v728 = vadd.f32 %v726, %v727
        %v729 = vrot.slane %v728, 2
        %v730 = vadd.f32 %v728, %v729
        %v731 = vrot.slane %v730, 1
        %v732 = vadd.f32 %v730, %v731
        %v733 = vld [vmem:[#allocation2] sm:$0x1]
        %735 = vset.pattern.permute.xlu0 0
        %736 = vperm.xlu0 %735, %v733
        %v737 = vpop.permute.xlu0 %736
        %v739 = vlaneseq
        %v740 = vshrl.u32 %v739, 7
        %v741 = vsub.s32 0, %v740
        %v742 = vrot.slane %v737, %v741
        %v743 = vadd.f32 %v732, %v742
        %744 = vst [vmem:[%s337] sm:$0x1] %v743
        %s745 = sand.u32 %s232, 1
        %s746 = scalar_lea.sflag [#allocation4], %s745
        %s747 = sand.u32 %s232, 1
        %s748 = scalar_lea.vmem [#allocation3], %s747
        // Predicated region
        $region57: #{tpu_custom_call.1} parent=55 // pred_check
          %p749 = pneg %p242
        $region58: #{tpu_custom_call.1} parent=55 // pred_check_branch
          %751 = sbr.rel (%p749) target = $region60
        $region59: #{tpu_custom_call.1} parent=55 // pred_region
          %s753 = ssub.s32 16, 16
          %754 = vsyncadd %s746, %s753
          %s755 = smul.addr %s25, 16
          %s756 = scalar_lea.hbm %s9, %s755
          %s758 = sshll.u32 %s748, 4
          %s759 = int_to_ptr.vmem [resolvable:$true] %s758
          %761 = dma.vmem_to_hbm [thread:$0]  %s759, 16, %s756, %s746
        $region60: #{tpu_custom_call.1} parent=55 // pred_fallthru
          _
      $region56: #{tpu_custom_call.1} parent=5 // pred_fallthru
        _
      %p762 = scmp.le.s32.totalorder 2, %s20
      // Predicated region
      $region61: #{tpu_custom_call.1} parent=5 // pred_check
        %p763 = pneg %p762
      $region62: #{tpu_custom_call.1} parent=5 // pred_check_branch
        %765 = sbr.rel (%p763) target = $region64
      $region63: #{tpu_custom_call.1} parent=5 // pred_region
        %s766 = ssub.s32 %s20, 2
        // Predicated region
        $region65: #{tpu_custom_call.1} parent=63 // pred_check
          %p767 = pneg %p248
        $region66: #{tpu_custom_call.1} parent=63 // pred_check_branch
          %769 = sbr.rel (%p767) target = $region68
        $region67: #{tpu_custom_call.1} parent=63 // pred_region
          %s770 = sand.u32 %s233, 1
          %s771 = scalar_lea.sflag [#allocation4], %s770
          %s772 = sand.u32 %s233, 1
          %s773 = scalar_lea.vmem [#allocation3], %s772
          %774 = dma.done %s771, 16
        $region68: #{tpu_custom_call.1} parent=63 // pred_fallthru
          _
      $region64: #{tpu_custom_call.1} parent=5 // pred_fallthru
        _
    $region6: #{tpu_custom_call.1} parent=1 // loop_footer
      %s24 = sadd.s32 1, %s20
    $region7: #{tpu_custom_call.1} parent=1 // loop_footer_branch
      %19 = sbr.rel target = $region3
    $region8: #{tpu_custom_call.1} parent=1 // loop_exit
      _
    %775 = vsyncpa [#allocation4], 1
    %s776 = scalar_lea.sflag [#allocation4], 1
    %777 = vsyncpa %s776, 1

</llo_original>
